<compile_context>
chip_gen: v5e
topology: v5e:2x2
jax: 0.10.0
libtpu: 0.0.40
codegen_flags: <defaults>
</compile_context>

<pallas_src>
import functools
import math

import jax
import jax.numpy as jnp
from jax.experimental import pallas as pl
from jax.experimental.pallas import tpu as pltpu

LANE = 128
SUB = 8


def _round_up(v, m):
    return ((v + m - 1) // m) * m


def actor_critic_kernel(x_ref, w_ref, out_ref, *, n_input_p, n_hidden_p, n_output):
    """Fused fc -> relu -> [mu|sigma|value] head matmul -> activations.

    w_ref row layout (all offsets are multiples of 8 sublanes):
      [0,               n_input_p)                : fc weight   (n_input_p, 128)
      [n_input_p,       n_input_p+8)              : fc bias     (row 0, rest 0)
      [n_input_p+8,     n_input_p+8+n_hidden_p)   : fused head weight (n_hidden_p, 128)
      [.. +n_hidden_p,  .. +n_hidden_p+8)         : fused head bias   (row 0)
    Head columns: [0,n_output)=mu  [n_output,2n)=sigma  [2n,2n+1)=value  rest=pad.
    """
    x = x_ref[...]                                                   # (B_p, n_input_p)

    wf = w_ref[0:n_input_p, :]                                       # (n_input_p, 128)
    bf = w_ref[n_input_p:n_input_p + 1, :]                           # (1, 128)
    r0 = n_input_p + SUB
    wh = w_ref[r0:r0 + n_hidden_p, :]                                # (n_hidden_p, 128)
    bh = w_ref[r0 + n_hidden_p:r0 + n_hidden_p + 1, :]               # (1, 128)

    # hidden = relu(x @ Wf + bf)   -- padded hidden lanes stay exactly 0.
    h = jnp.maximum(jnp.dot(x, wf, preferred_element_type=jnp.float32) + bf, 0.0)

    # Single fused head matmul for mu / sigma / value.
    heads = jnp.dot(h, wh, preferred_element_type=jnp.float32) + bh  # (B_p, 128)

    # Activations computed on the whole vreg (EUP work), then a per-lane select.
    mu = 2.0 * jnp.tanh(heads)
    softplus = jnp.maximum(heads, 0.0) + jnp.log1p(jnp.exp(-jnp.abs(heads)))
    sigma = softplus + 1e-5
    col = jax.lax.broadcasted_iota(jnp.int32, heads.shape, 1)
    out = jnp.where(col < n_output, mu,
                    jnp.where(col < 2 * n_output, sigma, heads))     # value = identity

    out_ref[...] = out                                               # one lane-dense store


@functools.partial(jax.jit, static_argnames=("n_input", "n_hidden", "n_output"))
def actor_critic_forward(x, w_slab, *, n_input, n_hidden, n_output):
    B = x.shape[0]
    B_p = _round_up(max(B, SUB), SUB)
    n_input_p = _round_up(n_input, LANE)
    n_hidden_p = _round_up(n_hidden, LANE)

    # Zero-pad the input to canonical (8, 128)-aligned layout (layout plumbing only).
    x_p = jnp.zeros((B_p, n_input_p), jnp.float32).at[:B, :n_input].set(x)

    vmem = pl.BlockSpec(memory_space=pltpu.MemorySpace.VMEM)
    out = pl.pallas_call(
        functools.partial(actor_critic_kernel,
                          n_input_p=n_input_p,
                          n_hidden_p=n_hidden_p,
                          n_output=n_output),
        out_shape=jax.ShapeDtypeStruct((B_p, LANE), jnp.float32),
        in_specs=[vmem, vmem],
        out_specs=vmem,
        cost_estimate=pl.CostEstimate(
            flops=2 * B_p * LANE * (n_input_p + n_hidden_p),
            transcendentals=3 * B_p * LANE,          # tanh + exp + log1p
            bytes_accessed=4 * (B_p * n_input_p + w_slab.size + B_p * LANE),
        ),
    )(x_p, w_slab)

    mu = out[:B, 0:n_output]
    sigma = out[:B, n_output:2 * n_output]
    value = out[:B, 2 * n_output:2 * n_output + 1]
    return mu, sigma, value


def init_params(key, n_input, n_hidden, n_output):
    # Deterministic init mimicking torch.nn.Linear: U(-1/sqrt(fan_in), 1/sqrt(fan_in)).
    def linear(key, fan_in, fan_out):
        kw, kb = jax.random.split(key)
        bound = 1.0 / math.sqrt(fan_in)
        w = jax.random.uniform(kw, (fan_in, fan_out), jnp.float32, -bound, bound)
        b = jax.random.uniform(kb, (1, fan_out), jnp.float32, -bound, bound)
        return w, b

    k_fc, k_mu, k_sigma, k_value = jax.random.split(key, 4)
    wf, bf = linear(k_fc, n_input, n_hidden)
    wm, bm = linear(k_mu, n_hidden, n_output)
    ws, bs = linear(k_sigma, n_hidden, n_output)
    wv, bv = linear(k_value, n_hidden, 1)
    return (wf, bf, wm, bm, ws, bs, wv, bv)


def pack_params(params, n_input, n_hidden, n_output):
    """One-time packing of all weights/biases into a single lane-dense VMEM slab."""
    wf, bf, wm, bm, ws, bs, wv, bv = params
    n_input_p = _round_up(n_input, LANE)
    n_hidden_p = _round_up(n_hidden, LANE)
    n_heads = 2 * n_output + 1
    assert n_heads <= LANE, "fused head width must fit one lane register"

    rows = n_input_p + SUB + n_hidden_p + SUB
    slab = jnp.zeros((rows, LANE), jnp.float32)

    # fc weight + bias (zero padding is mathematically inert).
    slab = slab.at[:n_input, :n_hidden].set(wf)
    slab = slab.at[n_input_p, :n_hidden].set(bf[0])

    # Fused head weight/bias: columns = [mu | sigma | value].
    w_heads = jnp.concatenate([wm, ws, wv], axis=1)   # (n_hidden, 2*n_output+1)
    b_heads = jnp.concatenate([bm, bs, bv], axis=1)   # (1, 2*n_output+1)
    r0 = n_input_p + SUB
    slab = slab.at[r0:r0 + n_hidden, :n_heads].set(w_heads)
    slab = slab.at[r0 + n_hidden_p, :n_heads].set(b_heads[0])
    return slab


def reference_forward(x, params):
    (wf, bf, wm, bm, ws, bs, wv, bv) = params
    h = jax.nn.relu(x @ wf + bf)
    mu = 2.0 * jnp.tanh(h @ wm + bm)
    sigma = jax.nn.softplus(h @ ws + bs) + 1e-5
    value = h @ wv + bv
    return mu, sigma, value


if __name__ == "__main__":
    # Small shapes consistent with the module: batch=1 (forward does mu.view(1)),
    # n_input=8, n_hidden=32, n_output=1.
    n_input, n_hidden, n_output, batch = 8, 32, 1, 1

    key = jax.random.PRNGKey(0)
    k_x, k_p = jax.random.split(key)
    x = jax.random.normal(k_x, (batch, n_input), dtype=jnp.float32)
    params = init_params(k_p, n_input, n_hidden, n_output)
    w_slab = pack_params(params, n_input, n_hidden, n_output)   # packed once, reused per call

    mu, sigma, value = actor_critic_forward(
        x, w_slab, n_input=n_input, n_hidden=n_hidden, n_output=n_output)
    jax.block_until_ready((mu, sigma, value))

    # TODO(synk): torch.distributions.Normal has no Pallas equivalent; the kernel
    # returns its parameters (mu, sigma) plus the critic value.
    mu_ref, sigma_ref, value_ref = reference_forward(x, params)
    assert jnp.allclose(mu, mu_ref, atol=1e-5)
    assert jnp.allclose(sigma, sigma_ref, atol=1e-5)
    assert jnp.allclose(value, value_ref, atol=1e-5)

    print("KERNEL_OK")
</pallas_src>

<mosaic_0001>
module attributes {stable_mosaic.version = 11 : i64} {
  func.func @actor_critic_kernel(%arg0: memref<8x128xf32, #tpu.memory_space<vmem>>, %arg1: memref<272x128xf32, #tpu.memory_space<vmem>>, %arg2: memref<8x128xf32, #tpu.memory_space<vmem>>) attributes {dimension_semantics = [], scalar_prefetch = 0 : i64, scratch_operands = 0 : i64, tpu.core_type = #tpu.core_type<tc>} {
    %c0 = arith.constant 0 : index
    %c0_0 = arith.constant 0 : index
    %0 = vector.load %arg0[%c0, %c0_0] : memref<8x128xf32, #tpu.memory_space<vmem>>, vector<8x128xf32>
    %c0_1 = arith.constant 0 : index
    %c0_2 = arith.constant 0 : index
    %1 = vector.load %arg1[%c0_1, %c0_2] : memref<272x128xf32, #tpu.memory_space<vmem>>, vector<128x128xf32>
    %c128 = arith.constant 128 : index
    %c0_3 = arith.constant 0 : index
    %2 = vector.load %arg1[%c128, %c0_3] : memref<272x128xf32, #tpu.memory_space<vmem>>, vector<1x128xf32>
    %c136 = arith.constant 136 : index
    %c0_4 = arith.constant 0 : index
    %3 = vector.load %arg1[%c136, %c0_4] : memref<272x128xf32, #tpu.memory_space<vmem>>, vector<128x128xf32>
    %c264 = arith.constant 264 : index
    %c0_5 = arith.constant 0 : index
    %4 = vector.load %arg1[%c264, %c0_5] : memref<272x128xf32, #tpu.memory_space<vmem>>, vector<1x128xf32>
    %cst = arith.constant dense<0.000000e+00> : vector<8x128xf32>
    %5 = tpu.matmul %0, %1, %cst {dimension_numbers = #tpu.dot_dimension_numbers<[1], [0], [0], [1], [0, 0, 1, 1], [], []>} : vector<8x128xf32>, vector<128x128xf32>, vector<8x128xf32> -> vector<8x128xf32>
    %6 = vector.broadcast %2 : vector<1x128xf32> to vector<8x128xf32>
    %7 = arith.addf %5, %6 : vector<8x128xf32>
    %cst_6 = arith.constant 0.000000e+00 : f32
    %8 = vector.broadcast %cst_6 : f32 to vector<8x128xf32>
    %9 = arith.maximumf %7, %8 : vector<8x128xf32>
    %cst_7 = arith.constant dense<0.000000e+00> : vector<8x128xf32>
    %10 = tpu.matmul %9, %3, %cst_7 {dimension_numbers = #tpu.dot_dimension_numbers<[1], [0], [0], [1], [0, 0, 1, 1], [], []>} : vector<8x128xf32>, vector<128x128xf32>, vector<8x128xf32> -> vector<8x128xf32>
    %11 = vector.broadcast %4 : vector<1x128xf32> to vector<8x128xf32>
    %12 = arith.addf %10, %11 : vector<8x128xf32>
    %13 = math.tanh %12 : vector<8x128xf32>
    %cst_8 = arith.constant 2.000000e+00 : f32
    %14 = vector.broadcast %cst_8 : f32 to vector<8x128xf32>
    %15 = arith.mulf %14, %13 : vector<8x128xf32>
    %cst_9 = arith.constant 0.000000e+00 : f32
    %16 = vector.broadcast %cst_9 : f32 to vector<8x128xf32>
    %17 = arith.maximumf %12, %16 : vector<8x128xf32>
    %18 = math.absf %12 : vector<8x128xf32>
    %cst_10 = arith.constant 0.000000e+00 : f32
    %19 = vector.broadcast %cst_10 : f32 to vector<8x128xf32>
    %20 = arith.subf %19, %18 : vector<8x128xf32>
    %21 = math.exp %20 : vector<8x128xf32>
    %22 = math.log1p %21 : vector<8x128xf32>
    %23 = arith.addf %17, %22 : vector<8x128xf32>
    %cst_11 = arith.constant 9.99999974E-6 : f32
    %24 = vector.broadcast %cst_11 : f32 to vector<8x128xf32>
    %25 = arith.addf %23, %24 : vector<8x128xf32>
    %26 = tpu.iota {dimensions = array<i32: 1>} : vector<8x128xi32>
    %c1_i32 = arith.constant 1 : i32
    %27 = vector.broadcast %c1_i32 : i32 to vector<8x128xi32>
    %28 = arith.cmpi slt, %26, %27 : vector<8x128xi32>
    %c2_i32 = arith.constant 2 : i32
    %29 = vector.broadcast %c2_i32 : i32 to vector<8x128xi32>
    %30 = arith.cmpi slt, %26, %29 : vector<8x128xi32>
    %31 = arith.select %30, %25, %12 : vector<8x128xi1>, vector<8x128xf32>
    %32 = arith.select %28, %15, %31 : vector<8x128xi1>, vector<8x128xf32>
    %c0_12 = arith.constant 0 : index
    %c0_13 = arith.constant 0 : index
    %33 = vector.load %arg2[%c0_12, %c0_13] : memref<8x128xf32, #tpu.memory_space<vmem>>, vector<8x128xf32>
    tpu.vector_store %arg2[%c0_12, %c0_13], %32 {strides = array<i32>} : memref<8x128xf32, #tpu.memory_space<vmem>>, vector<8x128xf32>,
    return
  }
}

</mosaic_0001>

<llo_original>
// kernel: actor_critic_forward.1
$region0: #{actor_critic_forward.1}
  #allocation0 [shape = 'u32[]', space=smem, size = 0x4, offset = 0x4, fixed_abs, tag = 'smem constant byte address 0x4 - core index']
  #allocation1 [shape = 'u32[72,128]{1,0:T(1,128)}', space=vmem, size = 0x9000, scoped, tag = 'internal scratch']
  %s0 = inlined_call_operand.vmem [shape: f32[8,128], index: 0, kind: input, shape index: {}]
  %s1 = inlined_call_operand.hbm [shape: f32[272,128], index: 1, kind: input, shape index: {}]
  %s2 = inlined_call_operand.vmem [shape: f32[8,128], index: 2, kind: output, shape index: {}]
  %s3 = sld [smem:[#allocation0]]
  $region22: #{actor_critic_forward.1} parent=0
    _
  %s5 = ssub.s32 1, %s3
  %s6 = scalar_select 0, %s5, %s3
  $region1: #{actor_critic_forward.1} parent=0
    #allocation2 [shape = 'u8[139264]{0}', space=vmem, size = 0x22000, scoped, tag = 'input window, operand 1, single buffered']
    #allocation3 [shape = 's32[1]{0}', space=sflag, size = 0x4, scoped, tag = 'scoped memory for actor_critic_forward.1']
    %7 = vsyncpa [#allocation3], 0
    // Predicated region
    $region2: #{actor_critic_forward.1} parent=1 // pred_check
      _
    $region3: #{actor_critic_forward.1} parent=1 // pred_check_branch
      %9 = sbr.rel (0) target = $region5
    $region4: #{actor_critic_forward.1} parent=1 // pred_region
      _
    $region5: #{actor_critic_forward.1} parent=1 // pred_fallthru
      _
    // Predicated region
    $region6: #{actor_critic_forward.1} parent=1 // pred_check
      _
    $region7: #{actor_critic_forward.1} parent=1 // pred_check_branch
      %11 = sbr.rel (0) target = $region9
    $region8: #{actor_critic_forward.1} parent=1 // pred_region
      %13 = vsyncadd [#allocation3], 0
      %s14 = sshll.u32 %s1, 4
      %s15 = int_to_ptr.hbm [resolvable:$true] %s14
      %s16 = sshll.u32 [#allocation2], 4
      %s17 = int_to_ptr.vmem [resolvable:$true] %s16
      %22 = dma.hbm_to_vmem [thread:$0]  %s15, 4352, %s17, [#allocation3], 128, 128, 8
    $region9: #{actor_critic_forward.1} parent=1 // pred_fallthru
      _
    // Predicated region
    $region10: #{actor_critic_forward.1} parent=1 // pred_check
      _
    $region11: #{actor_critic_forward.1} parent=1 // pred_check_branch
      %24 = sbr.rel (0) target = $region13
    $region12: #{actor_critic_forward.1} parent=1 // pred_region
      %26 = dma.done [#allocation3], 4352
    $region13: #{actor_critic_forward.1} parent=1 // pred_fallthru
      _
    %v27 = vld [vmem:[%s0] sm:$0xff]
    %v28 = vld [vmem:[#allocation2] sm:$0xff]
    %v29 = vld [vmem:[#allocation2 + $0x8] sm:$0xff]
    %v30 = vld [vmem:[#allocation2 + $0x10] sm:$0xff]
    %v31 = vld [vmem:[#allocation2 + $0x18] sm:$0xff]
    %v32 = vld [vmem:[#allocation2 + $0x20] sm:$0xff]
    %v33 = vld [vmem:[#allocation2 + $0x28] sm:$0xff]
    %v34 = vld [vmem:[#allocation2 + $0x30] sm:$0xff]
    %v35 = vld [vmem:[#allocation2 + $0x38] sm:$0xff]
    %v36 = vld [vmem:[#allocation2 + $0x40] sm:$0xff]
    %v37 = vld [vmem:[#allocation2 + $0x48] sm:$0xff]
    %v38 = vld [vmem:[#allocation2 + $0x50] sm:$0xff]
    %v39 = vld [vmem:[#allocation2 + $0x58] sm:$0xff]
    %v40 = vld [vmem:[#allocation2 + $0x60] sm:$0xff]
    %v41 = vld [vmem:[#allocation2 + $0x68] sm:$0xff]
    %v42 = vld [vmem:[#allocation2 + $0x70] sm:$0xff]
    %v43 = vld [vmem:[#allocation2 + $0x78] sm:$0xff]
    %v44 = vld [vmem:[#allocation2 + $0x80] sm:$0x1]
    %v45 = vld [vmem:[#allocation2 + $0x88] sm:$0xff]
    %v46 = vld [vmem:[#allocation2 + $0x90] sm:$0xff]
    %v47 = vld [vmem:[#allocation2 + $0x98] sm:$0xff]
    %v48 = vld [vmem:[#allocation2 + $0xa0] sm:$0xff]
    %v49 = vld [vmem:[#allocation2 + $0xa8] sm:$0xff]
    %v50 = vld [vmem:[#allocation2 + $0xb0] sm:$0xff]
    %v51 = vld [vmem:[#allocation2 + $0xb8] sm:$0xff]
    %v52 = vld [vmem:[#allocation2 + $0xc0] sm:$0xff]
    %v53 = vld [vmem:[#allocation2 + $0xc8] sm:$0xff]
    %v54 = vld [vmem:[#allocation2 + $0xd0] sm:$0xff]
    %v55 = vld [vmem:[#allocation2 + $0xd8] sm:$0xff]
    %v56 = vld [vmem:[#allocation2 + $0xe0] sm:$0xff]
    %v57 = vld [vmem:[#allocation2 + $0xe8] sm:$0xff]
    %v58 = vld [vmem:[#allocation2 + $0xf0] sm:$0xff]
    %v59 = vld [vmem:[#allocation2 + $0xf8] sm:$0xff]
    %v60 = vld [vmem:[#allocation2 + $0x100] sm:$0xff]
    %v61 = vld [vmem:[#allocation2 + $0x108] sm:$0x1]
    %v62 = vperm.slane %v44, 0
    %63 = vmatpush.msra.mxu0 %v43
    %64 = vmatpush.msra.mxu0 %v42
    %65 = vmatpush.msra.mxu0 %v41
    %66 = vmatpush.msra.mxu0 %v40
    %67 = vmatpush.msra.mxu0 %v39
    %68 = vmatpush.msra.mxu0 %v38
    %69 = vmatpush.msra.mxu0 %v37
    %70 = vmatpush.msra.mxu0 %v36
    %71 = vmatpush.msra.mxu0 %v35
    %72 = vmatpush.msra.mxu0 %v34
    %73 = vmatpush.msra.mxu0 %v33
    %74 = vmatpush.msra.mxu0 %v32
    %75 = vmatpush.msra.mxu0 %v31
    %76 = vmatpush.msra.mxu0 %v30
    %77 = vmatpush.msra.mxu0 %v29
    %78 = vmatpush.msra.mxu0 %v28
    %79 = vmatmul.f32.gmra.mxu0 %v27
    %v80 = vpop.f32.mrf.mxu0
    %v81 = vadd.f32 %v62, %v80
    %82 = vdwg.mxu0
    %v83 = vmax.f32 %v81, 0.0
    %v84 = vperm.slane %v61, 0
    %85 = vmatpush.msra.mxu0 %v60
    %86 = vmatpush.msra.mxu0 %v59
    %87 = vmatpush.msra.mxu0 %v58
    %88 = vmatpush.msra.mxu0 %v57
    %89 = vmatpush.msra.mxu0 %v56
    %90 = vmatpush.msra.mxu0 %v55
    %91 = vmatpush.msra.mxu0 %v54
    %92 = vmatpush.msra.mxu0 %v53
    %93 = vmatpush.msra.mxu0 %v52
    %94 = vmatpush.msra.mxu0 %v51
    %95 = vmatpush.msra.mxu0 %v50
    %96 = vmatpush.msra.mxu0 %v49
    %97 = vmatpush.msra.mxu0 %v48
    %98 = vmatpush.msra.mxu0 %v47
    %99 = vmatpush.msra.mxu0 %v46
    %100 = vmatpush.msra.mxu0 %v45
    %101 = vmatmul.f32.gmra.mxu0 %v83
    %v102 = vpop.f32.mrf.mxu0
    %v103 = vadd.f32 %v84, %v102
    %104 = vdwg.mxu0
    %v105 = vtanh.pop %v103
    %v106 = vmul.f32 %v105, 2.0
    %v107 = vmax.f32 %v103, 0.0
    %v108 = vand.u32 2147483647, %v103
    %v109 = vsub.f32 0.0, %v108
    %v110 = vmul.f32 %v109, 1.442695
    %v111 = vpow.pop %v110
    %v112 = vadd.f32 %v111, 1.0
    %v113 = vlog2.pop %v112
    %v114 = vmul.f32 %v113, 0.6931472
    %v115 = vmul.f32 -0.5, %v111
    %v116 = vadd.f32 %v115, 1.0
    %v117 = vmul.f32 %v116, %v111
    %v118 = vand.u32 2147483647, %v111
    %vm119 = vcmp.lt.f32.partialorder %v118, 0.0004427343
    %v120 = vsel %vm119, %v117, %v114
    %v121 = vadd.f32 %v107, %v120
    %v122 = vadd.f32 %v121, 1e-05
    %v123 = vlaneseq
    %v124 = vand.u32 %v123, 127
    %vm125 = vcmp.lt.s32.totalorder %v124, 1
    %vm126 = vcmp.lt.s32.totalorder %v124, 2
    %v127 = vsel %vm126, %v122, %v103
    %v128 = vsel %vm125, %v106, %v127
    %129 = vst [vmem:[%s2] sm:$0xff] %v128
    // Predicated region
    $region14: #{actor_critic_forward.1} parent=1 // pred_check
      _
    $region15: #{actor_critic_forward.1} parent=1 // pred_check_branch
      %131 = sbr.rel (0) target = $region17
    $region16: #{actor_critic_forward.1} parent=1 // pred_region
      _
    $region17: #{actor_critic_forward.1} parent=1 // pred_fallthru
      _
    // Predicated region
    $region18: #{actor_critic_forward.1} parent=1 // pred_check
      _
    $region19: #{actor_critic_forward.1} parent=1 // pred_check_branch
      %133 = sbr.rel (0) target = $region21
    $region20: #{actor_critic_forward.1} parent=1 // pred_region
      _
    $region21: #{actor_critic_forward.1} parent=1 // pred_fallthru
      _
    %134 = vsyncpa [#allocation3], 1

</llo_original>
